<compile_context>
chip_gen: v7x
topology: tpu7x:2x2x1
jax: 0.10.0
libtpu: 0.0.40
codegen_flags: <defaults>
</compile_context>

<pallas_src>
import jax
import jax.numpy as jnp
from jax.experimental import pallas as pl
from jax.experimental.pallas import tpu as pltpu

# ----------------------------- problem sizes ------------------------------
N, C, H, W = 2, 4, 16, 16          # batch, channels, spatial (small, synthetic)
HIDDEN = 32                        # hidden width of the synthetic flow net
PIX = H * W                        # 256 spatial positions -> lane axis
NC = N * C                         # 8  -> full 8-sublane vregs for elementwise
NH = N * HIDDEN                    # 64 -> block-diagonal hidden rows
PCOLS = NC + 1 + NH + 1            # packed-parameter lane width (74)


# ------------------------------ Pallas kernel ------------------------------
def _per_sample_col(t_ref, rows_per_sample, total_rows):
    """Build a (total_rows, 1) f32 column whose rows carry the per-sample t."""
    row = jax.lax.broadcasted_iota(jnp.int32, (total_rows, 1), 0)
    col = jnp.full((total_rows, 1), t_ref[0], dtype=jnp.float32)
    for n in range(1, N):                       # static unroll, N = 2
        col = jnp.where(row >= n * rows_per_sample, t_ref[n], col)
    return col


def rf_loss_kernel(t_ref, x_ref, p_ref, loss_ref):
    """Whole-problem rectified-flow MSE loss, single invocation (no grid).

    t_ref    : SMEM (N,)            per-sample interpolation time
    x_ref    : VMEM (2, N*C, PIX)   [rainy; clean] raw [0,1], spatial on lanes
    p_ref    : VMEM (N*H, PCOLS)    packed block-diag weights + biases
    loss_ref : VMEM (1, 1)          scalar mean-squared-error output
    """
    # Static slices into the packed parameter buffer (packed once, off hot path).
    w1bd = p_ref[:, 0:NC]                             # (NH, NC)  block-diag W1^T
    b1bd = p_ref[:, NC:NC + 1]                        # (NH, 1)   tiled b1
    w2bd = p_ref[0:NC, NC + 1:NC + 1 + NH]            # (NC, NH)  block-diag W2^T
    b2bd = p_ref[0:NC, NC + 1 + NH:NC + 2 + NH]       # (NC, 1)   tiled b2

    x0 = x_ref[0]                                     # (NC, PIX) rainy, raw [0,1]
    x1 = x_ref[1]                                     # (NC, PIX) clean, raw [0,1]

    # Per-row time columns built from SMEM scalars (no materialized t arrays).
    t_x = _per_sample_col(t_ref, C, NC)               # (NC, 1)
    t_h = _per_sample_col(t_ref, HIDDEN, NH)          # (NH, 1)

    # data_normalize_fn folded into interpolation/target:
    #   x0n = 2*x0-1, x1n = 2*x1-1
    #   flow_target = x1n - x0n = 2*(x1-x0)
    #   x_t = (1-t)*x0n + t*x1n = 2*(x0 + t*(x1-x0)) - 1
    r = x1 - x0                                       # (NC, PIX), full 8 sublanes
    flow_target = r + r                               # 2*r
    x_t = 2.0 * (x0 + t_x * r) - 1.0                  # (NC, PIX)

    # Both samples through ONE matmul pair via block-diagonal weights; MXU
    # N-dim is the lane-dense spatial axis.
    h = jnp.dot(w1bd, x_t, preferred_element_type=jnp.float32)     # (NH, PIX)
    h = jnp.maximum(h + b1bd + t_h, 0.0)                            # ReLU + time
    pred = jnp.dot(w2bd, h, preferred_element_type=jnp.float32)     # (NC, PIX)
    pred = pred + b2bd

    diff = pred - flow_target
    # Single cross-lane/sublane reduction for the whole kernel.
    loss_ref[...] = jnp.sum(diff * diff, axis=(0, 1), keepdims=True) * (
        1.0 / float(N * C * PIX))

    # TODO(synk): MSEWithFreqLoss frequency term needs an FFT; no clean Pallas
    # TPU equivalent, so only the MSE component is computed here.


# --------------------- one-time parameter preparation ----------------------
def prepare_params(params):
    """Pack flow-net parameters for the kernel.  Call ONCE per parameter update
    (e.g. after each optimizer step), NOT per loss evaluation."""
    w1, b1, w2, b2 = params
    w1t = jnp.transpose(w1).astype(jnp.float32)       # (HIDDEN, C)
    w2t = jnp.transpose(w2).astype(jnp.float32)       # (C, HIDDEN)
    b1c = b1.astype(jnp.float32).reshape(HIDDEN, 1)
    b2c = b2.astype(jnp.float32).reshape(C, 1)

    # Block-diagonal over the N samples so both samples share one matmul pair.
    w1bd = jnp.zeros((NH, NC), jnp.float32)
    w2bd = jnp.zeros((NC, NH), jnp.float32)
    for n in range(N):
        w1bd = w1bd.at[n * HIDDEN:(n + 1) * HIDDEN, n * C:(n + 1) * C].set(w1t)
        w2bd = w2bd.at[n * C:(n + 1) * C, n * HIDDEN:(n + 1) * HIDDEN].set(w2t)
    b1bd = jnp.tile(b1c, (N, 1))                      # (NH, 1)
    b2bd = jnp.tile(b2c, (N, 1))                      # (NC, 1)

    # Single packed VMEM buffer: sublanes = NH, lanes = packed columns.
    p = jnp.zeros((NH, PCOLS), jnp.float32)
    p = p.at[:, 0:NC].set(w1bd)
    p = p.at[:, NC:NC + 1].set(b1bd)
    p = p.at[0:NC, NC + 1:NC + 1 + NH].set(w2bd)
    p = p.at[0:NC, NC + 1 + NH:NC + 2 + NH].set(b2bd)
    return p


# ------------------------------ JAX wrapper --------------------------------
@jax.jit
def rectified_flow_loss(rainy_nchw, clean_nchw, t_per_sample, packed_params):
    """rainy/clean: (N, C, H, W) in [0,1]; t_per_sample: (N,);
    packed_params: output of prepare_params.  Returns scalar loss."""
    # NCHW -> (N*C, PIX) is a PURE reshape (valid only because the flow net is
    # pointwise in space); stack rainy/clean into ONE input stream so the
    # kernel has 3 DMA streams total.  Fuses with the pallas_call under jit.
    x = jnp.stack([
        rainy_nchw.reshape(NC, PIX),
        clean_nchw.reshape(NC, PIX),
    ]).astype(jnp.float32)                             # (2, NC, PIX)
    t = t_per_sample.astype(jnp.float32)

    loss = pl.pallas_call(
        rf_loss_kernel,
        out_shape=jax.ShapeDtypeStruct((1, 1), jnp.float32),
        in_specs=[
            pl.BlockSpec(memory_space=pltpu.MemorySpace.SMEM),   # t (scalars)
            pl.BlockSpec(memory_space=pltpu.MemorySpace.VMEM),   # stacked x0/x1
            pl.BlockSpec(memory_space=pltpu.MemorySpace.VMEM),   # packed params
        ],
        out_specs=pl.BlockSpec(memory_space=pltpu.MemorySpace.VMEM),
    )(t, x, packed_params)
    return loss[0, 0]


def reference_loss(rainy_nchw, clean_nchw, t_per_sample, params):
    """Plain-JAX reference (original row-wise pointwise-MLP formulation)."""
    w1, b1, w2, b2 = params
    x0 = jnp.transpose(rainy_nchw, (0, 2, 3, 1)).reshape(-1, C) * 2.0 - 1.0
    x1 = jnp.transpose(clean_nchw, (0, 2, 3, 1)).reshape(-1, C) * 2.0 - 1.0
    t = jnp.repeat(t_per_sample, H * W).reshape(-1, 1)
    x_t = (1.0 - t) * x0 + t * x1
    h = jnp.maximum(x_t @ w1 + b1.reshape(1, HIDDEN) + t, 0.0)
    pred = h @ w2 + b2.reshape(1, C)
    return jnp.mean((pred - (x1 - x0)) ** 2)


# ------------------------------ entry point --------------------------------
if __name__ == "__main__":
    key = jax.random.PRNGKey(0)
    k_rainy, k_clean, k_t, k_w1, k_b1, k_w2, k_b2 = jax.random.split(key, 7)

    # deterministic synthetic data (images in [0,1], NCHW like PyTorch)
    rainy = jax.random.uniform(k_rainy, (N, C, H, W), dtype=jnp.float32)
    clean = jax.random.uniform(k_clean, (N, C, H, W), dtype=jnp.float32)
    t_per_sample = jax.random.uniform(k_t, (N,), dtype=jnp.float32)

    # deterministic synthetic flow-net parameters
    w1 = jax.random.normal(k_w1, (C, HIDDEN), dtype=jnp.float32) * 0.1
    b1 = jax.random.normal(k_b1, (HIDDEN,), dtype=jnp.float32) * 0.1
    w2 = jax.random.normal(k_w2, (HIDDEN, C), dtype=jnp.float32) * 0.1
    b2 = jax.random.normal(k_b2, (C,), dtype=jnp.float32) * 0.1
    params = (w1, b1, w2, b2)

    # One-time packing (outside the training hot loop).
    packed = jax.block_until_ready(prepare_params(params))

    loss = rectified_flow_loss(rainy, clean, t_per_sample, packed)
    loss = jax.block_until_ready(loss)

    ref = reference_loss(rainy, clean, t_per_sample, params)
    assert jnp.allclose(loss, ref, rtol=1e-5, atol=1e-5), (loss, ref)

    print("KERNEL_OK")
</pallas_src>

<mosaic_0001>
module attributes {stable_mosaic.version = 11 : i64} {
  func.func @rf_loss_kernel(%arg0: memref<2xf32, #tpu.memory_space<smem>>, %arg1: memref<2x8x256xf32, #tpu.memory_space<vmem>>, %arg2: memref<64x74xf32, #tpu.memory_space<vmem>>, %arg3: memref<1x1xf32, #tpu.memory_space<vmem>>) attributes {dimension_semantics = [], scalar_prefetch = 0 : i64, scratch_operands = 0 : i64, tpu.core_type = #tpu.core_type<tc>} {
    %c0 = arith.constant 0 : index
    %c0_0 = arith.constant 0 : index
    %0 = vector.load %arg2[%c0, %c0_0] : memref<64x74xf32, #tpu.memory_space<vmem>>, vector<64x8xf32>
    %c0_1 = arith.constant 0 : index
    %c8 = arith.constant 8 : index
    %1 = vector.load %arg2[%c0_1, %c8] : memref<64x74xf32, #tpu.memory_space<vmem>>, vector<64x1xf32>
    %c0_2 = arith.constant 0 : index
    %c9 = arith.constant 9 : index
    %2 = vector.load %arg2[%c0_2, %c9] : memref<64x74xf32, #tpu.memory_space<vmem>>, vector<8x64xf32>
    %c0_3 = arith.constant 0 : index
    %c73 = arith.constant 73 : index
    %3 = vector.load %arg2[%c0_3, %c73] : memref<64x74xf32, #tpu.memory_space<vmem>>, vector<8x1xf32>
    %c0_4 = arith.constant 0 : index
    %c0_5 = arith.constant 0 : index
    %c0_6 = arith.constant 0 : index
    %4 = vector.load %arg1[%c0_4, %c0_5, %c0_6] : memref<2x8x256xf32, #tpu.memory_space<vmem>>, vector<1x8x256xf32>
    %5 = vector.shape_cast %4 : vector<1x8x256xf32> to vector<8x256xf32>
    %c1 = arith.constant 1 : index
    %c0_7 = arith.constant 0 : index
    %c0_8 = arith.constant 0 : index
    %6 = vector.load %arg1[%c1, %c0_7, %c0_8] : memref<2x8x256xf32, #tpu.memory_space<vmem>>, vector<1x8x256xf32>
    %7 = vector.shape_cast %6 : vector<1x8x256xf32> to vector<8x256xf32>
    %8 = tpu.iota {dimensions = array<i32: 0>} : vector<8x1xi32>
    %c0_9 = arith.constant 0 : index
    %9 = memref.load %arg0[%c0_9] : memref<2xf32, #tpu.memory_space<smem>>
    %10 = vector.broadcast %9 : f32 to vector<8x1xf32>
    %c4_i32 = arith.constant 4 : i32
    %11 = vector.broadcast %c4_i32 : i32 to vector<8x1xi32>
    %12 = arith.cmpi sge, %8, %11 : vector<8x1xi32>
    %c1_10 = arith.constant 1 : index
    %13 = memref.load %arg0[%c1_10] : memref<2xf32, #tpu.memory_space<smem>>
    %14 = vector.broadcast %13 : f32 to vector<8x1xf32>
    %15 = arith.select %12, %14, %10 : vector<8x1xi1>, vector<8x1xf32>
    %16 = tpu.iota {dimensions = array<i32: 0>} : vector<64x1xi32>
    %c0_11 = arith.constant 0 : index
    %17 = memref.load %arg0[%c0_11] : memref<2xf32, #tpu.memory_space<smem>>
    %18 = vector.broadcast %17 : f32 to vector<64x1xf32>
    %c32_i32 = arith.constant 32 : i32
    %19 = vector.broadcast %c32_i32 : i32 to vector<64x1xi32>
    %20 = arith.cmpi sge, %16, %19 : vector<64x1xi32>
    %c1_12 = arith.constant 1 : index
    %21 = memref.load %arg0[%c1_12] : memref<2xf32, #tpu.memory_space<smem>>
    %22 = vector.broadcast %21 : f32 to vector<64x1xf32>
    %23 = arith.select %20, %22, %18 : vector<64x1xi1>, vector<64x1xf32>
    %24 = arith.subf %7, %5 : vector<8x256xf32>
    %25 = arith.addf %24, %24 : vector<8x256xf32>
    %26 = vector.broadcast %15 : vector<8x1xf32> to vector<8x256xf32>
    %27 = arith.mulf %26, %24 : vector<8x256xf32>
    %28 = arith.addf %5, %27 : vector<8x256xf32>
    %cst = arith.constant 2.000000e+00 : f32
    %29 = vector.broadcast %cst : f32 to vector<8x256xf32>
    %30 = arith.mulf %29, %28 : vector<8x256xf32>
    %cst_13 = arith.constant 1.000000e+00 : f32
    %31 = vector.broadcast %cst_13 : f32 to vector<8x256xf32>
    %32 = arith.subf %30, %31 : vector<8x256xf32>
    %cst_14 = arith.constant dense<0.000000e+00> : vector<64x256xf32>
    %33 = tpu.matmul %0, %32, %cst_14 {dimension_numbers = #tpu.dot_dimension_numbers<[1], [0], [0], [1], [0, 0, 1, 1], [], []>} : vector<64x8xf32>, vector<8x256xf32>, vector<64x256xf32> -> vector<64x256xf32>
    %34 = vector.broadcast %1 : vector<64x1xf32> to vector<64x256xf32>
    %35 = arith.addf %33, %34 : vector<64x256xf32>
    %36 = vector.broadcast %23 : vector<64x1xf32> to vector<64x256xf32>
    %37 = arith.addf %35, %36 : vector<64x256xf32>
    %cst_15 = arith.constant 0.000000e+00 : f32
    %38 = vector.broadcast %cst_15 : f32 to vector<64x256xf32>
    %39 = arith.maximumf %37, %38 : vector<64x256xf32>
    %cst_16 = arith.constant dense<0.000000e+00> : vector<8x256xf32>
    %40 = tpu.matmul %2, %39, %cst_16 {dimension_numbers = #tpu.dot_dimension_numbers<[1], [0], [0], [1], [0, 0, 1, 1], [], []>} : vector<8x64xf32>, vector<64x256xf32>, vector<8x256xf32> -> vector<8x256xf32>
    %41 = vector.broadcast %3 : vector<8x1xf32> to vector<8x256xf32>
    %42 = arith.addf %40, %41 : vector<8x256xf32>
    %43 = arith.subf %42, %25 : vector<8x256xf32>
    %44 = arith.mulf %43, %43 : vector<8x256xf32>
    %45 = vector.shape_cast %44 : vector<8x256xf32> to vector<1x8x256xf32>
    %cst_17 = arith.constant dense<0.000000e+00> : vector<1xf32>
    %46 = vector.multi_reduction <add>, %45, %cst_17 [1, 2] : vector<1x8x256xf32> to vector<1xf32>
    %47 = vector.shape_cast %46 : vector<1xf32> to vector<1x1x1xf32>
    %48 = vector.extract %47[0, 0, 0] : f32 from vector<1x1x1xf32>
    %49 = vector.broadcast %48 : f32 to vector<1x1xf32>
    %cst_18 = arith.constant 4.8828125E-4 : f32
    %50 = vector.broadcast %cst_18 : f32 to vector<1x1xf32>
    %51 = arith.mulf %49, %50 : vector<1x1xf32>
    %c0_19 = arith.constant 0 : index
    %c0_20 = arith.constant 0 : index
    %52 = vector.load %arg3[%c0_19, %c0_20] : memref<1x1xf32, #tpu.memory_space<vmem>>, vector<1x1xf32>
    tpu.vector_store %arg3[%c0_19, %c0_20], %51 {strides = array<i32>} : memref<1x1xf32, #tpu.memory_space<vmem>>, vector<1x1xf32>,
    return
  }
}

</mosaic_0001>

<llo_original>
// kernel: rectified_flow_loss.1
$region0: #{rectified_flow_loss.1}
  #allocation0 [shape = 'u32[]', space=smem, size = 0x4, offset = 0x4, fixed_abs, tag = 'smem constant byte address 0x4 - core index']
  #allocation1 [shape = 'u32[144,128]{1,0:T(1,128)}', space=vmem, size = 0x12000, scoped, tag = 'internal scratch']
  %s0 = inlined_call_operand.vmem [shape: f32[2], index: 0, kind: input, shape index: {}]
  %s1 = inlined_call_operand.vmem [shape: f32[2,8,256], index: 1, kind: input, shape index: {}]
  %s2 = inlined_call_operand.vmem [shape: f32[64,74], index: 2, kind: input, shape index: {}]
  %s3 = inlined_call_operand.hbm [shape: f32[1,1], index: 3, kind: output, shape index: {}]
  %s4 = sld [smem:[#allocation0]]
  $region26: #{rectified_flow_loss.1} parent=0
    _
  %s6 = ssub.s32 1, %s4
  %s7 = scalar_select 0, %s6, %s4
  $region1: #{rectified_flow_loss.1} parent=0
    #allocation2 [shape = 'u8[512]{0}', space=smem, size = 0x200, scoped, tag = 'input window, operand 0, single buffered']
    #allocation3 [shape = 's32[1]{0}', space=sflag, size = 0x4, scoped, tag = 'scoped memory for rectified_flow_loss.1']
    #allocation4 [shape = 's32[1]{0}', space=sflag, size = 0x4, scoped, tag = 'scoped memory for rectified_flow_loss.1']
    #allocation5 [shape = 'u8[512]{0}', space=vmem, size = 0x400, scoped, tag = 'output window, operand 0, single buffered']
    %8 = vsyncpa [#allocation4], 0
    %9 = vsyncpa [#allocation3], 0
    // Predicated region
    $region2: #{rectified_flow_loss.1} parent=1 // pred_check
      _
    $region3: #{rectified_flow_loss.1} parent=1 // pred_check_branch
      %11 = sbr.rel (0) target = $region5
    $region4: #{rectified_flow_loss.1} parent=1 // pred_region
      %s13 = ssub.s32 16, 16
      %14 = vsyncadd [#allocation4], %s13
      %s16 = sshll.u32 %s0, 4
      %s17 = int_to_ptr.vmem [resolvable:$true] %s16
      %19 = dma.vmem_to_smem %s17, 16, [#allocation2], [#allocation4]
    $region5: #{rectified_flow_loss.1} parent=1 // pred_fallthru
      _
    // Predicated region
    $region6: #{rectified_flow_loss.1} parent=1 // pred_check
      _
    $region7: #{rectified_flow_loss.1} parent=1 // pred_check_branch
      %21 = sbr.rel (0) target = $region9
    $region8: #{rectified_flow_loss.1} parent=1 // pred_region
      _
    $region9: #{rectified_flow_loss.1} parent=1 // pred_fallthru
      _
    // Predicated region
    $region10: #{rectified_flow_loss.1} parent=1 // pred_check
      _
    $region11: #{rectified_flow_loss.1} parent=1 // pred_check_branch
      %23 = sbr.rel (0) target = $region13
    $region12: #{rectified_flow_loss.1} parent=1 // pred_region
      _
    $region13: #{rectified_flow_loss.1} parent=1 // pred_fallthru
      _
    // Predicated region
    $region14: #{rectified_flow_loss.1} parent=1 // pred_check
      _
    $region15: #{rectified_flow_loss.1} parent=1 // pred_check_branch
      %25 = sbr.rel (0) target = $region17
    $region16: #{rectified_flow_loss.1} parent=1 // pred_region
      %26 = dma.done [#allocation4], 16
    $region17: #{rectified_flow_loss.1} parent=1 // pred_fallthru
      _
    %27 = sfence
    %v28 = vld [vmem:[%s2] sm:$0xff]
    %v29 = vld [vmem:[%s2 + $0x8] sm:$0xff]
    %v30 = vld [vmem:[%s2 + $0x10] sm:$0xff]
    %v31 = vld [vmem:[%s2 + $0x18] sm:$0xff]
    %v32 = vld [vmem:[%s2 + $0x20] sm:$0xff]
    %v33 = vld [vmem:[%s2 + $0x28] sm:$0xff]
    %v34 = vld [vmem:[%s2 + $0x30] sm:$0xff]
    %v35 = vld [vmem:[%s2 + $0x38] sm:$0xff]
    %v36 = vld [vmem:[%s1] sm:$0xff]
    %v37 = vld [vmem:[%s1 + $0x8] sm:$0xff]
    %s38 = scalar_lea.vmem %s1, 16
    %v39 = vld [vmem:[%s38] sm:$0xff]
    %v40 = vld [vmem:[%s38 + $0x8] sm:$0xff]
    %v41 = vlaneseq
    %v42 = vshrl.u32 %v41, 7
    %s43 = sld [smem:[#allocation2]]
    %v44 = vstv %s43
    %vm45 = vcmp.ge.s32.totalorder %v42, 4
    %s46 = sld [smem:[#allocation2 + $0x1]]
    %v47 = vstv %s46
    %v48 = vsel %vm45, %v47, %v44
    %v49 = vadd.s32 %v42, 8
    %v50 = vadd.s32 %v42, 16
    %v51 = vadd.s32 %v42, 24
    %v52 = vadd.s32 %v42, 32
    %v53 = vadd.s32 %v42, 40
    %v54 = vadd.s32 %v42, 48
    %v55 = vadd.s32 %v42, 56
    %vm56 = vcmp.ge.s32.totalorder %v42, 32
    %vm57 = vcmp.ge.s32.totalorder %v49, 32
    %vm58 = vcmp.ge.s32.totalorder %v50, 32
    %vm59 = vcmp.ge.s32.totalorder %v51, 32
    %vm60 = vcmp.ge.s32.totalorder %v52, 32
    %vm61 = vcmp.ge.s32.totalorder %v53, 32
    %vm62 = vcmp.ge.s32.totalorder %v54, 32
    %vm63 = vcmp.ge.s32.totalorder %v55, 32
    %v64 = vsel %vm56, %v47, %v44
    %v65 = vsel %vm57, %v47, %v44
    %v66 = vsel %vm58, %v47, %v44
    %v67 = vsel %vm59, %v47, %v44
    %v68 = vsel %vm60, %v47, %v44
    %v69 = vsel %vm61, %v47, %v44
    %v70 = vsel %vm62, %v47, %v44
    %v71 = vsel %vm63, %v47, %v44
    %v72 = vsub.f32 %v39, %v36
    %v73 = vsub.f32 %v40, %v37
    %v74 = vadd.f32 %v72, %v72
    %v75 = vadd.f32 %v73, %v73
    %v76 = vmul.f32 %v48, %v72
    %v77 = vmul.f32 %v48, %v73
    %v78 = vadd.f32 %v36, %v76
    %v79 = vadd.f32 %v37, %v77
    %v80 = vmul.f32 %v78, 2.0
    %v81 = vmul.f32 %v79, 2.0
    %v82 = vsub.f32 %v80, 1.0
    %v83 = vsub.f32 %v81, 1.0
    %85 = vset.pattern.permute.xlu0 8
    %86 = vperm.xlu0 %85, %v28
    %v87 = vpop.permute.xlu0 %86
    %90 = vset.pattern.permute.xlu0 8
    %91 = vperm.xlu0 %90, %v29
    %v92 = vpop.permute.xlu0 %91
    %95 = vset.pattern.permute.xlu0 8
    %96 = vperm.xlu0 %95, %v30
    %v97 = vpop.permute.xlu0 %96
    %100 = vset.pattern.permute.xlu0 8
    %101 = vperm.xlu0 %100, %v31
    %v102 = vpop.permute.xlu0 %101
    %105 = vset.pattern.permute.xlu0 8
    %106 = vperm.xlu0 %105, %v32
    %v107 = vpop.permute.xlu0 %106
    %110 = vset.pattern.permute.xlu0 8
    %111 = vperm.xlu0 %110, %v33
    %v112 = vpop.permute.xlu0 %111
    %115 = vset.pattern.permute.xlu0 8
    %116 = vperm.xlu0 %115, %v34
    %v117 = vpop.permute.xlu0 %116
    %120 = vset.pattern.permute.xlu0 8
    %121 = vperm.xlu0 %120, %v35
    %v122 = vpop.permute.xlu0 %121
    %vm124 = vcmask 64512
    %v125 = vsel %vm124, %v28, 0
    %v127 = vsel %vm124, %v29, 0
    %v129 = vsel %vm124, %v30, 0
    %v131 = vsel %vm124, %v31, 0
    %v133 = vsel %vm124, %v32, 0
    %v135 = vsel %vm124, %v33, 0
    %v137 = vsel %vm124, %v34, 0
    %v139 = vsel %vm124, %v35, 0
    %141 = vmatprep.subr.mxu0 %v83
    %142 = vmatpush1.msra.mxu0 %v82
    %143 = vmatprep.subr.mxu0 0.0
    %144 = vmatpush1.msra.mxu0 0.0
    %145 = vmatprep.subr.mxu0 0.0
    %146 = vmatpush1.msra.mxu0 0.0
    %147 = vmatprep.subr.mxu0 0.0
    %148 = vmatpush1.msra.mxu0 0.0
    %149 = vmatprep.subr.mxu0 0.0
    %150 = vmatpush1.msra.mxu0 0.0
    %151 = vmatprep.subr.mxu0 0.0
    %152 = vmatpush1.msra.mxu0 0.0
    %153 = vmatprep.subr.mxu0 0.0
    %154 = vmatpush1.msra.mxu0 0.0
    %155 = vmatprep.subr.mxu0 0.0
    %156 = vmatpush1.msra.mxu0 0.0
    %157 = vmatprep.subr.mxu0 0.0
    %158 = vmatpush1.msra.mxu0 0.0
    %159 = vmatprep.subr.mxu0 0.0
    %160 = vmatpush1.msra.mxu0 0.0
    %161 = vmatprep.subr.mxu0 0.0
    %162 = vmatpush1.msra.mxu0 0.0
    %163 = vmatprep.subr.mxu0 0.0
    %164 = vmatpush1.msra.mxu0 0.0
    %165 = vmatprep.subr.mxu0 0.0
    %166 = vmatpush1.msra.mxu0 0.0
    %167 = vmatprep.subr.mxu0 0.0
    %168 = vmatpush1.msra.mxu0 0.0
    %169 = vmatprep.subr.mxu0 0.0
    %170 = vmatpush1.msra.mxu0 0.0
    %171 = vmatprep.subr.mxu0 0.0
    %172 = vmatpush1.msra.mxu0 0.0
    %173 = vmatprep.subr.mxu0 0.0
    %174 = vmatpush1.msra.mxu0 0.0
    %175 = vmatprep.subr.mxu0 0.0
    %176 = vmatpush1.msra.mxu0 0.0
    %177 = vmatprep.subr.mxu0 0.0
    %178 = vmatpush1.msra.mxu0 0.0
    %179 = vmatprep.subr.mxu0 0.0
    %180 = vmatpush1.msra.mxu0 0.0
    %181 = vmatprep.subr.mxu0 0.0
    %182 = vmatpush1.msra.mxu0 0.0
    %183 = vmatprep.subr.mxu0 0.0
    %184 = vmatpush1.msra.mxu0 0.0
    %185 = vmatprep.subr.mxu0 0.0
    %186 = vmatpush1.msra.mxu0 0.0
    %187 = vmatprep.subr.mxu0 0.0
    %188 = vmatpush1.msra.mxu0 0.0
    %189 = vmatprep.subr.mxu0 0.0
    %190 = vmatpush1.msra.mxu0 0.0
    %191 = vmatprep.subr.mxu0 0.0
    %192 = vmatpush1.msra.mxu0 0.0
    %193 = vmatprep.subr.mxu0 0.0
    %194 = vmatpush1.msra.mxu0 0.0
    %195 = vmatprep.subr.mxu0 0.0
    %196 = vmatpush1.msra.mxu0 0.0
    %197 = vmatprep.subr.mxu0 0.0
    %198 = vmatpush1.msra.mxu0 0.0
    %199 = vmatprep.subr.mxu0 0.0
    %200 = vmatpush1.msra.mxu0 0.0
    %201 = vmatprep.subr.mxu0 0.0
    %202 = vmatpush1.msra.mxu0 0.0
    %203 = vmatprep.subr.mxu0 0.0
    %204 = vmatpush1.msra.mxu0 0.0
    %205 = vmatprep.mubr.f32.mxu0 0.0
    %206 = vmatmul.mubr.f32.gmra.mrb[0].mxu0 %v125
    %v207 = vpop.f32.mrb[0].mxu0
    %v208 = vadd.f32 %v87, %v207
    %v209 = vpop.f32.mrb[0].mxu0
    %v210 = vadd.f32 %v87, %v209
    %211 = vmatprep.mubr.f32.mxu0 0.0
    %212 = vmatmul.mubr.f32.gmra.mrb[0].mxu0 %v127
    %v213 = vpop.f32.mrb[0].mxu0
    %v214 = vadd.f32 %v92, %v213
    %v215 = vpop.f32.mrb[0].mxu0
    %v216 = vadd.f32 %v92, %v215
    %217 = vmatprep.mubr.f32.mxu0 0.0
    %218 = vmatmul.mubr.f32.gmra.mrb[0].mxu0 %v129
    %v219 = vpop.f32.mrb[0].mxu0
    %v220 = vadd.f32 %v97, %v219
    %v221 = vpop.f32.mrb[0].mxu0
    %v222 = vadd.f32 %v97, %v221
    %223 = vmatprep.mubr.f32.mxu0 0.0
    %224 = vmatmul.mubr.f32.gmra.mrb[0].mxu0 %v131
    %v225 = vpop.f32.mrb[0].mxu0
    %v226 = vadd.f32 %v102, %v225
    %v227 = vpop.f32.mrb[0].mxu0
    %v228 = vadd.f32 %v102, %v227
    %229 = vmatprep.mubr.f32.mxu0 0.0
    %230 = vmatmul.mubr.f32.gmra.mrb[0].mxu0 %v133
    %v231 = vpop.f32.mrb[0].mxu0
    %v232 = vadd.f32 %v107, %v231
    %v233 = vpop.f32.mrb[0].mxu0
    %v234 = vadd.f32 %v107, %v233
    %235 = vmatprep.mubr.f32.mxu0 0.0
    %236 = vmatmul.mubr.f32.gmra.mrb[0].mxu0 %v135
    %v237 = vpop.f32.mrb[0].mxu0
    %v238 = vadd.f32 %v112, %v237
    %v239 = vpop.f32.mrb[0].mxu0
    %v240 = vadd.f32 %v112, %v239
    %241 = vmatprep.mubr.f32.mxu0 0.0
    %242 = vmatmul.mubr.f32.gmra.mrb[0].mxu0 %v137
    %v243 = vpop.f32.mrb[0].mxu0
    %v244 = vadd.f32 %v117, %v243
    %v245 = vpop.f32.mrb[0].mxu0
    %v246 = vadd.f32 %v117, %v245
    %247 = vmatprep.mubr.f32.mxu0 0.0
    %248 = vmatmul.mubr.f32.gmra.mrb[0].mxu0 %v139
    %v249 = vpop.f32.mrb[0].mxu0
    %v250 = vadd.f32 %v122, %v249
    %v251 = vpop.f32.mrb[0].mxu0
    %v252 = vadd.f32 %v122, %v251
    %253 = vdwg.mxu0
    %v254 = vadd.f32 %v208, %v64
    %v255 = vadd.f32 %v210, %v64
    %v256 = vadd.f32 %v214, %v65
    %v257 = vadd.f32 %v216, %v65
    %v258 = vadd.f32 %v220, %v66
    %v259 = vadd.f32 %v222, %v66
    %v260 = vadd.f32 %v226, %v67
    %v261 = vadd.f32 %v228, %v67
    %v262 = vadd.f32 %v232, %v68
    %v263 = vadd.f32 %v234, %v68
    %v264 = vadd.f32 %v238, %v69
    %v265 = vadd.f32 %v240, %v69
    %v266 = vadd.f32 %v244, %v70
    %v267 = vadd.f32 %v246, %v70
    %v268 = vadd.f32 %v250, %v71
    %v269 = vadd.f32 %v252, %v71
    %v270 = vmax.f32 %v254, 0.0
    %v271 = vmax.f32 %v255, 0.0
    %v272 = vmax.f32 %v256, 0.0
    %v273 = vmax.f32 %v257, 0.0
    %v274 = vmax.f32 %v258, 0.0
    %v275 = vmax.f32 %v259, 0.0
    %v276 = vmax.f32 %v260, 0.0
    %v277 = vmax.f32 %v261, 0.0
    %v278 = vmax.f32 %v262, 0.0
    %v279 = vmax.f32 %v263, 0.0
    %v280 = vmax.f32 %v264, 0.0
    %v281 = vmax.f32 %v265, 0.0
    %v282 = vmax.f32 %v266, 0.0
    %v283 = vmax.f32 %v267, 0.0
    %v284 = vmax.f32 %v268, 0.0
    %v285 = vmax.f32 %v269, 0.0
    %286 = vset.pattern.permute.xlu0 73
    %287 = vperm.xlu0 %286, %v28
    %v288 = vpop.permute.xlu0 %287
    %290 = vrot.lane.b32.xlu0 %v28, 119
    %v291 = vpop.permute.xlu0 %290
    %vm292 = vcmask 523264
    %v293 = vsel %vm292, %v291, 0
    %295 = vmatprep.subr.mxu0 %v271
    %296 = vmatpush1.msra.mxu0 %v270
    %297 = vmatprep.subr.mxu0 %v273
    %298 = vmatpush1.msra.mxu0 %v272
    %299 = vmatprep.subr.mxu0 %v275
    %300 = vmatpush1.msra.mxu0 %v274
    %301 = vmatprep.subr.mxu0 %v277
    %302 = vmatpush1.msra.mxu0 %v276
    %303 = vmatprep.subr.mxu0 %v279
    %304 = vmatpush1.msra.mxu0 %v278
    %305 = vmatprep.subr.mxu0 %v281
    %306 = vmatpush1.msra.mxu0 %v280
    %307 = vmatprep.subr.mxu0 %v283
    %308 = vmatpush1.msra.mxu0 %v282
    %309 = vmatprep.subr.mxu0 %v285
    %310 = vmatpush1.msra.mxu0 %v284
    %311 = vmatprep.subr.mxu0 0.0
    %312 = vmatpush1.msra.mxu0 0.0
    %313 = vmatprep.subr.mxu0 0.0
    %314 = vmatpush1.msra.mxu0 0.0
    %315 = vmatprep.subr.mxu0 0.0
    %316 = vmatpush1.msra.mxu0 0.0
    %317 = vmatprep.subr.mxu0 0.0
    %318 = vmatpush1.msra.mxu0 0.0
    %319 = vmatprep.subr.mxu0 0.0
    %320 = vmatpush1.msra.mxu0 0.0
    %321 = vmatprep.subr.mxu0 0.0
    %322 = vmatpush1.msra.mxu0 0.0
    %323 = vmatprep.subr.mxu0 0.0
    %324 = vmatpush1.msra.mxu0 0.0
    %325 = vmatprep.subr.mxu0 0.0
    %326 = vmatpush1.msra.mxu0 0.0
    %327 = vmatprep.subr.mxu0 0.0
    %328 = vmatpush1.msra.mxu0 0.0
    %329 = vmatprep.subr.mxu0 0.0
    %330 = vmatpush1.msra.mxu0 0.0
    %331 = vmatprep.subr.mxu0 0.0
    %332 = vmatpush1.msra.mxu0 0.0
    %333 = vmatprep.subr.mxu0 0.0
    %334 = vmatpush1.msra.mxu0 0.0
    %335 = vmatprep.subr.mxu0 0.0
    %336 = vmatpush1.msra.mxu0 0.0
    %337 = vmatprep.subr.mxu0 0.0
    %338 = vmatpush1.msra.mxu0 0.0
    %339 = vmatprep.subr.mxu0 0.0
    %340 = vmatpush1.msra.mxu0 0.0
    %341 = vmatprep.subr.mxu0 0.0
    %342 = vmatpush1.msra.mxu0 0.0
    %343 = vmatprep.subr.mxu0 0.0
    %344 = vmatpush1.msra.mxu0 0.0
    %345 = vmatprep.subr.mxu0 0.0
    %346 = vmatpush1.msra.mxu0 0.0
    %347 = vmatprep.subr.mxu0 0.0
    %348 = vmatpush1.msra.mxu0 0.0
    %349 = vmatprep.subr.mxu0 0.0
    %350 = vmatpush1.msra.mxu0 0.0
    %351 = vmatprep.subr.mxu0 0.0
    %352 = vmatpush1.msra.mxu0 0.0
    %353 = vmatprep.subr.mxu0 0.0
    %354 = vmatpush1.msra.mxu0 0.0
    %355 = vmatprep.subr.mxu0 0.0
    %356 = vmatpush1.msra.mxu0 0.0
    %357 = vmatprep.subr.mxu0 0.0
    %358 = vmatpush1.msra.mxu0 0.0
    %359 = vmatprep.mubr.f32.mxu0 0.0
    %360 = vmatmul.mubr.f32.gmra.mrb[0].mxu0 %v293
    %v361 = vpop.f32.mrb[0].mxu0
    %v362 = vadd.f32 %v288, %v361
    %v363 = vpop.f32.mrb[0].mxu0
    %v364 = vadd.f32 %v288, %v363
    %365 = vdwg.mxu0
    %v366 = vsub.f32 %v362, %v74
    %v367 = vsub.f32 %v364, %v75
    %v368 = vmul.f32 %v366, %v366
    %v369 = vmul.f32 %v367, %v367
    %v370 = vadd.f32 %v368, %v369
    %371 = vadd.xlane.f32.xlu0 %v370
    %v372 = vpop.xlane.xlu0 %371
    %v373 = vrot.slane %v372, 4
    %v374 = vadd.f32 %v372, %v373
    %v375 = vrot.slane %v374, 2
    %v376 = vadd.f32 %v374, %v375
    %v377 = vrot.slane %v376, 1
    %v378 = vadd.f32 %v376, %v377
    %s379 = vtos %v378
    %v380 = vstv %s379
    %v381 = vmul.f32 %v380, 0.00048828125
    %vm382 = vcmask 0
    %383 = vst.msk [vmem:[#allocation5] sm:$0x1] %vm382, %v381
    // Predicated region
    $region18: #{rectified_flow_loss.1} parent=1 // pred_check
      _
    $region19: #{rectified_flow_loss.1} parent=1 // pred_check_branch
      %385 = sbr.rel (0) target = $region21
    $region20: #{rectified_flow_loss.1} parent=1 // pred_region
      %s387 = ssub.s32 16, 16
      %388 = vsyncadd [#allocation3], %s387
      %s390 = sshll.u32 [#allocation5], 4
      %s391 = int_to_ptr.vmem [resolvable:$true] %s390
      %393 = dma.vmem_to_hbm [thread:$0]  %s391, 16, %s3, [#allocation3]
    $region21: #{rectified_flow_loss.1} parent=1 // pred_fallthru
      _
    // Predicated region
    $region22: #{rectified_flow_loss.1} parent=1 // pred_check
      _
    $region23: #{rectified_flow_loss.1} parent=1 // pred_check_branch
      %395 = sbr.rel (0) target = $region25
    $region24: #{rectified_flow_loss.1} parent=1 // pred_region
      %396 = dma.done [#allocation3], 16
    $region25: #{rectified_flow_loss.1} parent=1 // pred_fallthru
      _
    %397 = vsyncpa [#allocation3], 1
    %398 = vsyncpa [#allocation4], 1

</llo_original>
